<compile_context>
chip_gen: v7x
topology: tpu7x:2x2x1
jax: 0.10.0
libtpu: 0.0.40
codegen_flags: <defaults>
</compile_context>

<pallas_src>
import functools

import jax
import jax.numpy as jnp
from jax.experimental import pallas as pl
from jax.experimental.pallas import tpu as pltpu


_NEG_SLOPE = 0.2  # nn.LeakyReLU(negative_slope=0.2) used by both metaconvs / ResLinear


def _lrelu(x):
    return jnp.where(x >= 0, x, _NEG_SLOPE * x)


def _round_up(n, m):
    return -(-n // m) * m


def _compiler_params(dimension_semantics, vmem_bytes_hint):
    """CompilerParams with a scoped-VMEM budget clamped to ~90% of chip capacity."""
    try:
        cap = int(getattr(pltpu.get_tpu_info(), "vmem_capacity_bytes", 64 << 20))
    except Exception:
        cap = 64 << 20                                                  # safe on every gen
    limit = int(min(max(int(vmem_bytes_hint), 32 << 20), int(cap * 0.9)))
    return pltpu.CompilerParams(dimension_semantics=dimension_semantics,
                                vmem_limit_bytes=limit)


# ---------------------------------------------------------------------------
# Kernel 1: k-NN scores.
#   score[b, i, j] = 2 x_i.x_j - ||x_j||^2
# Equals the reference pairwise negative squared distance up to the per-row constant
# -||x_i||^2, which cannot change the top-k result along j.
# ---------------------------------------------------------------------------
def _knn_score_kernel(xi_ref, xj_ref, sqj_ref, o_ref):
    xi = xi_ref[0]                                                      # (TI, D)
    xj = xj_ref[0]                                                      # (TJ, D)
    inner = jax.lax.dot_general(xi, xj, (((1,), (1,)), ((), ())),
                                preferred_element_type=jnp.float32)     # (TI, TJ)
    o_ref[0] = 2.0 * inner - sqj_ref[0]                                 # row-broadcast ||x_j||^2


def _knn_scores(xyz):
    B, N, D = xyz.shape
    xyz = xyz.astype(jnp.float32)
    T = N if N <= 512 else 512                                          # 512 keeps v7x headroom
    n_pad = _round_up(N, T)
    sq = jnp.sum(xyz * xyz, axis=-1)                                    # (B, N), computed once
    if n_pad != N:
        pad = n_pad - N
        xyz = jnp.pad(xyz, ((0, 0), (0, pad), (0, 0)))
        # +inf squared norm for pad columns -> score == -inf -> never picked by top_k,
        # so no sliced copy of the (N_pad, N_pad) score matrix is needed.
        sq = jnp.pad(sq, ((0, 0), (0, pad)), constant_values=float("inf"))
    sq = sq[:, None, :]                                                 # (B, 1, n_pad)
    grid = (B, n_pad // T, n_pad // T)
    return pl.pallas_call(
        _knn_score_kernel,
        out_shape=jax.ShapeDtypeStruct((B, n_pad, n_pad), jnp.float32),
        grid=grid,
        in_specs=[pl.BlockSpec((1, T, D), lambda b, i, j: (b, i, 0)),
                  pl.BlockSpec((1, T, D), lambda b, i, j: (b, j, 0)),
                  pl.BlockSpec((1, 1, T), lambda b, i, j: (b, 0, j))],
        out_specs=pl.BlockSpec((1, T, T), lambda b, i, j: (b, i, j)),
        compiler_params=_compiler_params(
            ("parallel", "parallel", "parallel"),
            2 * (T * T * 4) + 4 * (T * D * 4) + 2 * (T * 4) + (4 << 20)),
    )(xyz, xyz, sq)


@functools.partial(jax.jit, static_argnames=("k",))
def _knn_indices(xyz, k):
    N = xyz.shape[1]
    scores = _knn_scores(xyz)                                           # (B, n_pad, n_pad)
    # TODO(synk): for very large N the (B, N, N) score matrix + XLA top_k is the dominant
    # HBM cost; a streaming in-kernel top-k over j tiles (O(N*k) output) is not implemented.
    _, idx = jax.lax.top_k(scores, k)                                   # (B, n_pad, k) int32
    return idx[:, :N, 1:]                                               # drop self, drop pad rows


# ---------------------------------------------------------------------------
# Kernel 2: fused GAT-meta block (channel-first, lane-dense output).
# Grid (b, i, m): i tiles the output N axis, m chunks the adjacency/reduction N axis.
#   m == 0 : o = W1' @ lrelu(x_tile)            (W1' = W1/k + I -> mean + residual folded)
#   every m: o += Z_chunk @ AdjT_chunk          (Z = (W2/k) @ lrelu(points), hoisted, bf16)
# ---------------------------------------------------------------------------
def _gat_meta_kernel(z_ref, x_ref, idxt_ref, w1_ref, o_ref, *, nc):
    m = pl.program_id(2)

    @pl.when(m == 0)
    def _():
        act_tile = _lrelu(x_ref[0])                                     # (C, TN)  f32
        o_ref[0] = jnp.dot(w1_ref[...], act_tile,
                           preferred_element_type=jnp.float32)

    idx_t = idxt_ref[0]                                                 # (K, TN) int32
    kk, tn = idx_t.shape
    base = m * nc
    row_ids = jax.lax.broadcasted_iota(jnp.int32, (nc, tn), 0) + base

    # AdjT[r, t] = #{ j : idx[t, j] == base + r }: K cheap VPU compares accumulated in
    # int32, converted to the matmul dtype once (counts <= K are exact in bf16).
    acc = (row_ids == idx_t[0:1, :]).astype(jnp.int32)
    for j in range(1, kk):                                              # K-1 small & static
        acc = acc + (row_ids == idx_t[j:j + 1, :]).astype(jnp.int32)
    adj = acc.astype(jnp.float32).astype(jnp.bfloat16)                  # (NC, TN)

    o_ref[0] += jnp.dot(z_ref[0], adj, preferred_element_type=jnp.float32)


def _fused_gat_meta(points, z, idx_t, w1p):
    """points: (B, C, N) f32, z: (B, C, N) bf16, idx_t: (B, K, N) i32, w1p: (C, C) f32."""
    B, C, N = points.shape
    K = idx_t.shape[1]
    TN = N if N <= 256 else 256                                         # lane-dense output tiles
    n_pad = _round_up(N, TN)
    if n_pad != N:
        pad = n_pad - N
        points = jnp.pad(points, ((0, 0), (0, 0), (0, pad)))
        z = jnp.pad(z, ((0, 0), (0, 0), (0, pad)))                      # pad cols of Z are 0
        idx_t = jnp.pad(idx_t, ((0, 0), (0, 0), (0, pad)))              # pad out cols are sliced
    if n_pad <= 512:
        NC = n_pad
    elif n_pad % 512 == 0:
        NC = 512
    else:
        NC = 256                                                        # n_pad is a multiple of 256
    grid = (B, n_pad // TN, n_pad // NC)

    hint = (2 * (C * NC * 2 + C * TN * 4 + K * TN * 4 + C * C * 4 + C * TN * 4)
            + NC * TN * (4 + 4 + 4 + 2) + (4 << 20))

    out = pl.pallas_call(
        functools.partial(_gat_meta_kernel, nc=NC),
        out_shape=jax.ShapeDtypeStruct((B, C, n_pad), jnp.float32),
        grid=grid,
        in_specs=[
            pl.BlockSpec((1, C, NC), lambda b, i, m: (b, 0, m)),        # Z chunk (varies with m)
            pl.BlockSpec((1, C, TN), lambda b, i, m: (b, 0, i)),        # points tile (resident over m)
            pl.BlockSpec((1, K, TN), lambda b, i, m: (b, 0, i)),        # idx tile (resident over m)
            pl.BlockSpec((C, C), lambda b, i, m: (0, 0)),               # W1' (resident)
        ],
        out_specs=pl.BlockSpec((1, C, TN), lambda b, i, m: (b, 0, i)),  # f32 accumulator block
        compiler_params=_compiler_params(("parallel", "parallel", "arbitrary"), hint),
    )(z, points, idx_t, w1p)
    if n_pad != N:
        out = out[:, :, :N]
    return out


# ---------------------------------------------------------------------------
# Meta-weight generation (ResLinear on a scalar) + wrapper.  O(C^2*32) work done once
# per forward -> plain jnp so XLA fuses it.
# ---------------------------------------------------------------------------
def _meta_conv_weight(scale, p, n_cout, n_cin):
    w11, b11, w12, b12, wsk, bsk = p
    s = scale[0]
    h = _lrelu(w11[:, 0] * s + b11)                                     # fc11 + LeakyReLU(0.2)
    flat = w12 @ h + b12 + (wsk[:, 0] * s + bsk)                        # fc12(.) + fcskip(scale)
    return flat.reshape(n_cout, n_cin)                                  # .view(Cout, Cin, 1, 1)


@jax.jit
def _core(points, idx, scale, p1, p2):
    B, C, N = points.shape
    K = idx.shape[-1]                                                   # k - 1 neighbors
    W1 = _meta_conv_weight(scale, p1, C, C)
    W2 = _meta_conv_weight(scale, p2, C, C)
    reg_loss = (0.5 * jnp.sum(W1 * W1) + 0.5 * jnp.sum(W2 * W2)).reshape(1)

    inv = jnp.float32(1.0 / (K + 1))                                    # mean over K+1 columns
    w1p = W1 * inv + jnp.eye(C, dtype=jnp.float32)                      # fold mean + residual
    pts = points.astype(jnp.float32)
    # Hoisted metaconv2: Z = (W2/k) @ lrelu(points), tiny CxC matmul, bf16 for the MXU.
    z = jnp.einsum('oc,bcn->bon', W2 * inv, _lrelu(pts)).astype(jnp.bfloat16)
    idx_t = jnp.transpose(idx.astype(jnp.int32), (0, 2, 1))             # (B, K, N): N on lanes
    features = _fused_gat_meta(pts, z, idx_t, w1p)                      # (B, C, N)
    return features, reg_loss


def res_gat_meta_block_forward(points, up_scale, params1, params2, scale_tensors,
                               *, k, indices=None, xyz=None, mask_t=None):
    """points: (B, C, N).  Mirrors res_GAT_meta_block.forward return signature."""
    # TODO(synk): the mask_t branch calls self.metamask, which is undefined in the
    # reference module (it would raise AttributeError); only mask_t=None is supported.
    assert mask_t is None
    s_idx = int((up_scale ** 2 - 1.1) / 0.1)                            # scale_tensors lookup
    scale = scale_tensors[s_idx]
    if indices is None:
        assert xyz is not None and k >= 2
        idx = _knn_indices(xyz, k=k)                                    # (B, N, k-1) int32
        features, reg_loss = _core(points, idx, scale, params1, params2)
        return features, None, None, None, reg_loss, idx
    features, reg_loss = _core(points, jnp.asarray(indices, jnp.int32), scale,
                               params1, params2)
    return features, None, None, None, reg_loss


if __name__ == "__main__":
    def reslinear_params(key, n_in, n_out, n_hidden=32, std=0.01):
        # skipfc2 (ResLinear n_in -> 32 -> n_out), fc_init_: trunc-normal(std=0.01), bias 0
        kw1, kw2, kw3 = jax.random.split(key, 3)
        w11 = std * jax.random.truncated_normal(kw1, -2.0, 2.0, (n_hidden, n_in), jnp.float32)
        w12 = std * jax.random.truncated_normal(kw2, -2.0, 2.0, (n_out, n_hidden), jnp.float32)
        wsk = std * jax.random.truncated_normal(kw3, -2.0, 2.0, (n_out, n_in), jnp.float32)
        return (w11, jnp.zeros((n_hidden,), jnp.float32),
                w12, jnp.zeros((n_out,), jnp.float32),
                wsk, jnp.zeros((n_out,), jnp.float32))

    def run_case(case_key, B, C, N, k, up_scale):
        kp, kx, k1, k2 = jax.random.split(case_key, 4)
        points = jax.random.normal(kp, (B, C, N), dtype=jnp.float32)
        xyz = jax.random.normal(kx, (B, N, 3), dtype=jnp.float32)
        params1 = reslinear_params(k1, 1, C * C)                        # metaconv1.skipfc2
        params2 = reslinear_params(k2, 1, C * C)                        # metaconv2.skipfc2
        # register_buffer('scale_tensors'): sqrt(up_scales)/sqrt(up_scales[-1]), shape (80, 1)
        up_scales = 1.1 + 0.1 * jnp.arange(80, dtype=jnp.float32)
        scale_tensors = (jnp.sqrt(up_scales) / jnp.sqrt(up_scales[-1]))[:, None]

        outs = res_gat_meta_block_forward(points, up_scale, params1, params2,
                                          scale_tensors, k=k, xyz=xyz)
        outs = jax.block_until_ready(outs)
        features, _, _, _, reg_loss, idx = outs

        assert features.shape == (B, C, N)
        assert reg_loss.shape == (1,)
        assert idx.shape == (B, N, k - 1)
        assert bool(jnp.all(jnp.isfinite(features)))
        assert bool(jnp.all((idx >= 0) & (idx < N)))

        # pure-JAX reference of the fused math (same neighbor indices)
        scale = scale_tensors[int((up_scale ** 2 - 1.1) / 0.1)]
        W1 = _meta_conv_weight(scale, params1, C, C)
        W2 = _meta_conv_weight(scale, params2, C, C)
        act = _lrelu(points)                                            # inplace-activated shortcut
        gathered = jax.vmap(lambda a, i: a[:, i])(points, idx)          # (B, C, N, K) original vals
        g_act = _lrelu(gathered)
        ref = jnp.mean(jnp.concatenate(
            [jnp.einsum('oi,bin->bon', W1, act)[..., None],
             jnp.einsum('oi,bink->bonk', W2, g_act)], axis=3), axis=3) + act
        err = float(jnp.max(jnp.abs(features - ref)))
        assert err < 2e-3, err
        ref_reg = (0.5 * jnp.sum(W1 * W1) + 0.5 * jnp.sum(W2 * W2)).reshape(1)
        assert bool(jnp.allclose(reg_loss, ref_reg, atol=1e-5, rtol=1e-5))

    root = jax.random.PRNGKey(0)
    key1, key2 = jax.random.split(root)
    # Case 1: small, divisible shapes (single chunk, no padding).
    run_case(key1, B=2, C=32, N=64, k=8, up_scale=2.0)
    # Case 2: non-divisible N -> padded tiles, multi-chunk adjacency reduction axis.
    run_case(key2, B=1, C=48, N=600, k=5, up_scale=1.5)
    print("KERNEL_OK")
</pallas_src>

<mosaic_0001>
module attributes {stable_mosaic.version = 11 : i64} {
  func.func @_knn_score_kernel(%arg0: i32, %arg1: i32, %arg2: i32, %arg3: memref<1x64x3xf32, #tpu.memory_space<vmem>>, %arg4: memref<1x64x3xf32, #tpu.memory_space<vmem>>, %arg5: memref<1x1x64xf32, #tpu.memory_space<vmem>>, %arg6: memref<1x64x64xf32, #tpu.memory_space<vmem>>) attributes {dimension_semantics = [#tpu.dimension_semantics<parallel>, #tpu.dimension_semantics<parallel>, #tpu.dimension_semantics<parallel>], iteration_bounds = array<i64: 2, 1, 1>, scalar_prefetch = 0 : i64, scratch_operands = 0 : i64, tpu.core_type = #tpu.core_type<tc>, window_params = [{transform_indices = @transform_0, window_bounds = array<i64: 1, 64, 3>}, {transform_indices = @transform_1, window_bounds = array<i64: 1, 64, 3>}, {transform_indices = @transform_2, window_bounds = array<i64: 1, 1, 64>}, {transform_indices = @transform_3, window_bounds = array<i64: 1, 64, 64>}]} {
    %c0 = arith.constant 0 : index
    %c0_0 = arith.constant 0 : index
    %c0_1 = arith.constant 0 : index
    %0 = vector.load %arg3[%c0, %c0_0, %c0_1] : memref<1x64x3xf32, #tpu.memory_space<vmem>>, vector<1x64x3xf32>
    %1 = vector.shape_cast %0 : vector<1x64x3xf32> to vector<64x3xf32>
    %c0_2 = arith.constant 0 : index
    %c0_3 = arith.constant 0 : index
    %c0_4 = arith.constant 0 : index
    %2 = vector.load %arg4[%c0_2, %c0_3, %c0_4] : memref<1x64x3xf32, #tpu.memory_space<vmem>>, vector<1x64x3xf32>
    %3 = vector.shape_cast %2 : vector<1x64x3xf32> to vector<64x3xf32>
    %cst = arith.constant dense<0.000000e+00> : vector<64x64xf32>
    %4 = tpu.matmul %1, %3, %cst {dimension_numbers = #tpu.dot_dimension_numbers<[1], [1], [0], [0], [0, 0, 1, 0], [], []>} : vector<64x3xf32>, vector<64x3xf32>, vector<64x64xf32> -> vector<64x64xf32>
    %cst_5 = arith.constant 2.000000e+00 : f32
    %5 = vector.broadcast %cst_5 : f32 to vector<64x64xf32>
    %6 = arith.mulf %5, %4 : vector<64x64xf32>
    %c0_6 = arith.constant 0 : index
    %c0_7 = arith.constant 0 : index
    %c0_8 = arith.constant 0 : index
    %7 = vector.load %arg5[%c0_6, %c0_7, %c0_8] : memref<1x1x64xf32, #tpu.memory_space<vmem>>, vector<1x1x64xf32>
    %8 = vector.shape_cast %7 : vector<1x1x64xf32> to vector<1x64xf32>
    %9 = vector.broadcast %8 : vector<1x64xf32> to vector<64x64xf32>
    %10 = arith.subf %6, %9 : vector<64x64xf32>
    %c0_9 = arith.constant 0 : index
    %c0_10 = arith.constant 0 : index
    %c0_11 = arith.constant 0 : index
    %11 = vector.load %arg6[%c0_9, %c0_10, %c0_11] : memref<1x64x64xf32, #tpu.memory_space<vmem>>, vector<1x64x64xf32>
    %12 = vector.shape_cast %11 : vector<1x64x64xf32> to vector<64x64xf32>
    %13 = vector.shape_cast %10 : vector<64x64xf32> to vector<1x64x64xf32>
    tpu.vector_store %arg6[%c0_9, %c0_10, %c0_11], %13 {strides = array<i32>} : memref<1x64x64xf32, #tpu.memory_space<vmem>>, vector<1x64x64xf32>,
    return
  }
  func.func @transform_0(%arg0: i32, %arg1: i32, %arg2: i32) -> (i32, i32, i32) {
    %c0_i32 = arith.constant 0 : i32
    %c0_i32_0 = arith.constant 0 : i32
    return %arg0, %arg1, %c0_i32 : i32, i32, i32
  }
  func.func @transform_1(%arg0: i32, %arg1: i32, %arg2: i32) -> (i32, i32, i32) {
    %c0_i32 = arith.constant 0 : i32
    %c0_i32_0 = arith.constant 0 : i32
    return %arg0, %arg2, %c0_i32 : i32, i32, i32
  }
  func.func @transform_2(%arg0: i32, %arg1: i32, %arg2: i32) -> (i32, i32, i32) {
    %c0_i32 = arith.constant 0 : i32
    %c0_i32_0 = arith.constant 0 : i32
    return %arg0, %c0_i32, %arg2 : i32, i32, i32
  }
  func.func @transform_3(%arg0: i32, %arg1: i32, %arg2: i32) -> (i32, i32, i32) {
    %c0_i32 = arith.constant 0 : i32
    return %arg0, %arg1, %arg2 : i32, i32, i32
  }
}

</mosaic_0001>

<llo_original>
// kernel: _knn_indices.1
$region0: #{_knn_indices.1}
  #allocation0 [shape = 'u32[]', space=smem, size = 0x4, offset = 0x4, fixed_abs, tag = 'smem constant byte address 0x4 - core index']
  #allocation1 [shape = 'u32[144,128]{1,0:T(1,128)}', space=vmem, size = 0x12000, scoped, tag = 'internal scratch']
  %s0 = inlined_call_operand.vmem [shape: f32[2,64,3], index: 0, kind: input, shape index: {}, may-alias: {0,1}]
  %s1 = inlined_call_operand.vmem [shape: f32[2,64,3], index: 1, kind: input, shape index: {}, may-alias: {0,1}]
  %s2 = inlined_call_operand.vmem [shape: f32[2,1,64], index: 2, kind: input, shape index: {}]
  %s3 = inlined_call_operand.vmem [shape: f32[2,64,64], index: 3, kind: output, shape index: {}]
  %s4 = sld [smem:[#allocation0]]
  $region45: #{_knn_indices.1} parent=0
    _
  %s6 = ssub.s32 1, %s4
  %s7 = scalar_select 0, %s6, %s4
  loop: start=0, step=1, limit=4
  $region2: #{_knn_indices.1} parent=0 // loop_pre_header
    _
  $region3: #{_knn_indices.1} parent=0 // loop_header
    %s9 = sphi 0, %s13
    %p10 = scmp.ge.s32.totalorder %s9, 4
    %s16 = sphi 0, %s35
    %s17 = sphi 0, %s31
    %s18 = sphi 0, %s27
    %s19 = sphi 0, %s16
    %s20 = sphi 0, %s17
    %s21 = sphi 0, %s18
    %s22 = sphi 0, %s19
    %s23 = sphi 0, %s20
    %s24 = sphi 0, %s21
    %s40 = sphi 0, %s42
    %s43 = sphi 0, %s40
    %s44 = sphi 0, %s43
    %s60 = sphi 0, %s44
    %s68 = sphi 0, %s70
    %s71 = sphi 0, %s68
    %s72 = sphi 0, %s71
    %s88 = sphi 0, %s72
    %s96 = sphi 0, %s98
    %s99 = sphi 0, %s96
    %s100 = sphi 0, %s99
    %s116 = sphi 0, %s100
    %s126 = sphi 0, %s128
    %s129 = sphi 0, %s126
    %s130 = sphi 0, %s129
    %s146 = sphi 0, %s130
  $region4: #{_knn_indices.1} parent=0 // loop_header_branch
    %12 = sbr.rel (%p10) target = $region8
  $region5: #{_knn_indices.1} parent=0 // loop_body
    %s14 = ssub.s32 %s9, 1
    %s15 = ssub.s32 %s9, 2
    %s25 = sadd.s32 1, %s18
    %p26 = scmp.ge.s32.totalorder %s25, 1
    %s27 = scalar_select %p26, 0, %s25
    %s28 = sadd.s32 1, %s17
    %s29 = scalar_select %p26, %s28, %s17
    %p30 = scmp.ge.s32.totalorder %s29, 1
    %s31 = scalar_select %p30, 0, %s29
    %s32 = sadd.s32 1, %s16
    %s33 = scalar_select %p30, %s32, %s16
    %p34 = scmp.ge.s32.totalorder %s33, 2
    %s35 = scalar_select %p34, 0, %s33
    %s36 = ssub.s32 %s16, %s35
    %s37 = ssub.s32 %s17, %s31
    %s38 = sor.u32 %s36, %s37
    %p39 = scmp.eq.s32.totalorder %s38, 0
    %s41 = sadd.s32 %s40, 1
    %s42 = scalar_select %p39, %s40, %s41
    %p45 = pneg %p39
    %p46 = scmp.eq.s32.totalorder %s9, 1
    %p47 = por %p45, %p46
    %p48 = scmp.ne.s32.totalorder %s40, %s43
    %p49 = scmp.eq.s32.totalorder %s9, 0
    %p50 = por %p48, %p49
    %p51 = scmp.ne.s32.totalorder %s40, %s43
    %p52 = scmp.eq.s32.totalorder %s14, 1
    %p53 = por %p51, %p52
    %p54 = scmp.ne.s32.totalorder %s43, %s44
    %p55 = scmp.eq.s32.totalorder %s14, 0
    %p56 = por %p54, %p55
    %p57 = scmp.ne.s32.totalorder %s43, %s44
    %p58 = scmp.eq.s32.totalorder %s15, 1
    %p59 = por %p57, %p58
    %p61 = scmp.ne.s32.totalorder %s44, %s60
    %p62 = scmp.eq.s32.totalorder %s15, 0
    %p63 = por %p61, %p62
    %s64 = ssub.s32 %s16, %s35
    %s65 = ssub.s32 %s18, %s27
    %s66 = sor.u32 %s64, %s65
    %p67 = scmp.eq.s32.totalorder %s66, 0
    %s69 = sadd.s32 %s68, 1
    %s70 = scalar_select %p67, %s68, %s69
    %p73 = pneg %p67
    %p74 = scmp.eq.s32.totalorder %s9, 1
    %p75 = por %p73, %p74
    %p76 = scmp.ne.s32.totalorder %s68, %s71
    %p77 = scmp.eq.s32.totalorder %s9, 0
    %p78 = por %p76, %p77
    %p79 = scmp.ne.s32.totalorder %s68, %s71
    %p80 = scmp.eq.s32.totalorder %s14, 1
    %p81 = por %p79, %p80
    %p82 = scmp.ne.s32.totalorder %s71, %s72
    %p83 = scmp.eq.s32.totalorder %s14, 0
    %p84 = por %p82, %p83
    %p85 = scmp.ne.s32.totalorder %s71, %s72
    %p86 = scmp.eq.s32.totalorder %s15, 1
    %p87 = por %p85, %p86
    %p89 = scmp.ne.s32.totalorder %s72, %s88
    %p90 = scmp.eq.s32.totalorder %s15, 0
    %p91 = por %p89, %p90
    %s92 = ssub.s32 %s16, %s35
    %s93 = ssub.s32 %s18, %s27
    %s94 = sor.u32 %s92, %s93
    %p95 = scmp.eq.s32.totalorder %s94, 0
    %s97 = sadd.s32 %s96, 1
    %s98 = scalar_select %p95, %s96, %s97
    %p101 = pneg %p95
    %p102 = scmp.eq.s32.totalorder %s9, 1
    %p103 = por %p101, %p102
    %p104 = scmp.ne.s32.totalorder %s96, %s99
    %p105 = scmp.eq.s32.totalorder %s9, 0
    %p106 = por %p104, %p105
    %p107 = scmp.ne.s32.totalorder %s96, %s99
    %p108 = scmp.eq.s32.totalorder %s14, 1
    %p109 = por %p107, %p108
    %p110 = scmp.ne.s32.totalorder %s99, %s100
    %p111 = scmp.eq.s32.totalorder %s14, 0
    %p112 = por %p110, %p111
    %p113 = scmp.ne.s32.totalorder %s99, %s100
    %p114 = scmp.eq.s32.totalorder %s15, 1
    %p115 = por %p113, %p114
    %p117 = scmp.ne.s32.totalorder %s100, %s116
    %p118 = scmp.eq.s32.totalorder %s15, 0
    %p119 = por %p117, %p118
    %s120 = ssub.s32 %s16, %s35
    %s121 = ssub.s32 %s17, %s31
    %s122 = sor.u32 %s120, %s121
    %s123 = ssub.s32 %s18, %s27
    %s124 = sor.u32 %s122, %s123
    %p125 = scmp.eq.s32.totalorder %s124, 0
    %s127 = sadd.s32 %s126, 1
    %s128 = scalar_select %p125, %s126, %s127
    %p131 = pneg %p125
    %p132 = scmp.eq.s32.totalorder %s9, 1
    %p133 = por %p131, %p132
    %p134 = scmp.ne.s32.totalorder %s126, %s129
    %p135 = scmp.eq.s32.totalorder %s9, 0
    %p136 = por %p134, %p135
    %p137 = scmp.ne.s32.totalorder %s126, %s129
    %p138 = scmp.eq.s32.totalorder %s14, 1
    %p139 = por %p137, %p138
    %p140 = scmp.ne.s32.totalorder %s129, %s130
    %p141 = scmp.eq.s32.totalorder %s14, 0
    %p142 = por %p140, %p141
    %p143 = scmp.ne.s32.totalorder %s129, %s130
    %p144 = scmp.eq.s32.totalorder %s15, 1
    %p145 = por %p143, %p144
    %p147 = scmp.ne.s32.totalorder %s130, %s146
    %p148 = scmp.eq.s32.totalorder %s15, 0
    %p149 = por %p147, %p148
    %p150 = scmp.le.s32.totalorder 1, %s9
    %p151 = scmp.lt.s32.totalorder %s9, 3
    %p152 = pnand %p150, %p151
    %p153 = pneg %p152
    // Predicated region
    $region9: #{_knn_indices.1} parent=5 // pred_check
      _
    $region10: #{_knn_indices.1} parent=5 // pred_check_branch
      %155 = sbr.rel (%p152) target = $region12
    $region11: #{_knn_indices.1} parent=5 // pred_region
      %s156 = ssub.s32 %s9, 1
    $region12: #{_knn_indices.1} parent=5 // pred_fallthru
      _
    %p157 = scmp.lt.s32.totalorder %s9, 2
    // Predicated region
    $region13: #{_knn_indices.1} parent=5 // pred_check
      %p158 = pneg %p157
    $region14: #{_knn_indices.1} parent=5 // pred_check_branch
      %160 = sbr.rel (%p158) target = $region16
    $region15: #{_knn_indices.1} parent=5 // pred_region
      // Predicated region
      $region17: #{_knn_indices.1} parent=15 // pred_check
        %p161 = pneg %p50
      $region18: #{_knn_indices.1} parent=15 // pred_check_branch
        %163 = sbr.rel (%p161) target = $region20
      $region19: #{_knn_indices.1} parent=15 // pred_region
        %s164 = smul.u32 8, %s17
        %p165 = scmp.lt.s32.totalorder %s16, 1
        %s166 = scalar_select %p165, %s16, 1
        %p167 = scmp.lt.s32.totalorder %s164, 7
        %s168 = scalar_select %p167, %s164, 7
        %s169 = smul.addr %s166, 8
        %s170 = sadd.s32 %s168, %s169
        %s171 = smul.addr %s170, 8
        %s172 = scalar_lea.vmem %s0, %s171
        %s173 = smul.u32 8, %s17
      $region20: #{_knn_indices.1} parent=15 // pred_fallthru
        _
      // Predicated region
      $region21: #{_knn_indices.1} parent=15 // pred_check
        %p174 = pneg %p78
      $region22: #{_knn_indices.1} parent=15 // pred_check_branch
        %176 = sbr.rel (%p174) target = $region24
      $region23: #{_knn_indices.1} parent=15 // pred_region
        %s177 = smul.u32 8, %s18
        %p178 = scmp.lt.s32.totalorder %s16, 1
        %s179 = scalar_select %p178, %s16, 1
        %p180 = scmp.lt.s32.totalorder %s177, 7
        %s181 = scalar_select %p180, %s177, 7
        %s182 = smul.addr %s179, 8
        %s183 = sadd.s32 %s181, %s182
        %s184 = smul.addr %s183, 8
        %s185 = scalar_lea.vmem %s1, %s184
        %s186 = smul.u32 8, %s18
      $region24: #{_knn_indices.1} parent=15 // pred_fallthru
        _
      // Predicated region
      $region25: #{_knn_indices.1} parent=15 // pred_check
        %p187 = pneg %p106
      $region26: #{_knn_indices.1} parent=15 // pred_check_branch
        %189 = sbr.rel (%p187) target = $region28
      $region27: #{_knn_indices.1} parent=15 // pred_region
        %p190 = scmp.lt.s32.totalorder %s16, 1
        %s191 = scalar_select %p190, %s16, 1
        %p192 = scmp.lt.s32.totalorder %s18, 0
        %s193 = scalar_select %p192, %s18, 0
        %s194 = sadd.s32 %s193, %s191
        %s195 = scalar_lea.vmem %s2, %s194
      $region28: #{_knn_indices.1} parent=15 // pred_fallthru
        _
    $region16: #{_knn_indices.1} parent=5 // pred_fallthru
      _
    %p196 = scmp.le.s32.totalorder 1, %s9
    %p197 = scmp.lt.s32.totalorder %s9, 3
    %p198 = pnand %p196, %p197
    %p199 = pneg %p198
    // Predicated region
    $region29: #{_knn_indices.1} parent=5 // pred_check
      _
    $region30: #{_knn_indices.1} parent=5 // pred_check_branch
      %201 = sbr.rel (%p198) target = $region32
    $region31: #{_knn_indices.1} parent=5 // pred_region
      %s202 = ssub.s32 %s9, 1
      %s203 = smul.u32 8, %s20
      %p204 = scmp.lt.s32.totalorder %s19, 1
      %s205 = scalar_select %p204, %s19, 1
      %p206 = scmp.lt.s32.totalorder %s203, 7
      %s207 = scalar_select %p206, %s203, 7
      %s208 = smul.addr %s205, 8
      %s209 = sadd.s32 %s207, %s208
      %s210 = smul.addr %s209, 8
      %s211 = scalar_lea.vmem %s0, %s210
      %p212 = pneg %p56
      %p213 = pneg %p53
      %s214 = smul.u32 8, %s21
      %p215 = scmp.lt.s32.totalorder %s19, 1
      %s216 = scalar_select %p215, %s19, 1
      %p217 = scmp.lt.s32.totalorder %s214, 7
      %s218 = scalar_select %p217, %s214, 7
      %s219 = smul.addr %s216, 8
      %s220 = sadd.s32 %s218, %s219
      %s221 = smul.addr %s220, 8
      %s222 = scalar_lea.vmem %s1, %s221
      %p223 = pneg %p84
      %p224 = pneg %p81
      %p225 = scmp.lt.s32.totalorder %s19, 1
      %s226 = scalar_select %p225, %s19, 1
      %p227 = scmp.lt.s32.totalorder %s21, 0
      %s228 = scalar_select %p227, %s21, 0
      %s229 = sadd.s32 %s228, %s226
      %s230 = scalar_lea.vmem %s2, %s229
      %p231 = pneg %p112
      %p232 = pneg %p109
      %p233 = pneg %p142
      %p234 = pneg %p139
      %s235 = smul.u32 8, %s20
      %p236 = scmp.lt.s32.totalorder %s19, 1
      %s237 = scalar_select %p236, %s19, 1
      %p238 = scmp.lt.s32.totalorder %s235, 7
      %s239 = scalar_select %p238, %s235, 7
      %p240 = scmp.lt.s32.totalorder %s21, 0
      %s241 = scalar_select %p240, %s21, 0
      %s242 = sadd.s32 %s241, %s239
      %s243 = smul.addr %s237, 8
      %s244 = sadd.s32 %s242, %s243
      %s245 = smul.addr %s244, 8
      %s246 = scalar_lea.vmem %s3, %s245
      %s247 = smul.u32 8, %s20
      %p248 = scmp.lt.s32.totalorder %s19, 1
      %s249 = scalar_select %p248, %s19, 1
      %p250 = scmp.lt.s32.totalorder %s247, 7
      %s251 = scalar_select %p250, %s247, 7
      %s252 = smul.addr %s249, 8
      %s253 = sadd.s32 %s251, %s252
      %s254 = smul.addr %s253, 8
      %s255 = scalar_lea.vmem %s0, %s254
      %s256 = smul.u32 8, %s20
      %s257 = smul.u32 8, %s21
      %p258 = scmp.lt.s32.totalorder %s19, 1
      %s259 = scalar_select %p258, %s19, 1
      %p260 = scmp.lt.s32.totalorder %s257, 7
      %s261 = scalar_select %p260, %s257, 7
      %s262 = smul.addr %s259, 8
      %s263 = sadd.s32 %s261, %s262
      %s264 = smul.addr %s263, 8
      %s265 = scalar_lea.vmem %s1, %s264
      %s266 = smul.u32 8, %s21
      %p267 = scmp.lt.s32.totalorder %s19, 1
      %s268 = scalar_select %p267, %s19, 1
      %p269 = scmp.lt.s32.totalorder %s21, 0
      %s270 = scalar_select %p269, %s21, 0
      %s271 = sadd.s32 %s270, %s268
      %s272 = scalar_lea.vmem %s2, %s271
      %s273 = smul.u32 8, %s20
      %p274 = scmp.lt.s32.totalorder %s19, 1
      %s275 = scalar_select %p274, %s19, 1
      %p276 = scmp.lt.s32.totalorder %s273, 7
      %s277 = scalar_select %p276, %s273, 7
      %p278 = scmp.lt.s32.totalorder %s21, 0
      %s279 = scalar_select %p278, %s21, 0
      %s280 = sadd.s32 %s279, %s277
      %s281 = smul.addr %s275, 8
      %s282 = sadd.s32 %s280, %s281
      %s283 = smul.addr %s282, 8
      %s284 = scalar_lea.vmem %s3, %s283
      %s285 = smul.u32 8, %s20
      %v286 = vld [vmem:[%s255] sm:$0xff]
      %v287 = vld [vmem:[%s255 + $0x8] sm:$0xff]
      %v288 = vld [vmem:[%s255 + $0x10] sm:$0xff]
      %v289 = vld [vmem:[%s255 + $0x18] sm:$0xff]
      %v290 = vld [vmem:[%s255 + $0x20] sm:$0xff]
      %v291 = vld [vmem:[%s255 + $0x28] sm:$0xff]
      %v292 = vld [vmem:[%s255 + $0x30] sm:$0xff]
      %v293 = vld [vmem:[%s255 + $0x38] sm:$0xff]
      %v294 = vld [vmem:[%s265] sm:$0xff]
      %v295 = vld [vmem:[%s265 + $0x8] sm:$0xff]
      %v296 = vld [vmem:[%s265 + $0x10] sm:$0xff]
      %v297 = vld [vmem:[%s265 + $0x18] sm:$0xff]
      %v298 = vld [vmem:[%s265 + $0x20] sm:$0xff]
      %v299 = vld [vmem:[%s265 + $0x28] sm:$0xff]
      %v300 = vld [vmem:[%s265 + $0x30] sm:$0xff]
      %v301 = vld [vmem:[%s265 + $0x38] sm:$0xff]
      %vm302 = vcmask 23552
      %v304 = vsel %vm302, %v286, 0
      %v307 = vsel %vm302, %v287, 0
      %v310 = vsel %vm302, %v288, 0
      %v313 = vsel %vm302, %v289, 0
      %v316 = vsel %vm302, %v290, 0
      %v319 = vsel %vm302, %v291, 0
      %v322 = vsel %vm302, %v292, 0
      %v325 = vsel %vm302, %v293, 0
      %v328 = vsel %vm302, %v294, 0
      %v331 = vsel %vm302, %v295, 0
      %v334 = vsel %vm302, %v296, 0
      %v337 = vsel %vm302, %v297, 0
      %v340 = vsel %vm302, %v298, 0
      %v343 = vsel %vm302, %v299, 0
      %v346 = vsel %vm302, %v300, 0
      %v349 = vsel %vm302, %v301, 0
      %351 = vmatprep.subr.mxu0 0.0
      %352 = vmatpush1.xpose.msra.mxu0 %v328
      %353 = vmatprep.subr.mxu0 0.0
      %354 = vmatpush1.xpose.msra.mxu0 %v331
      %355 = vmatprep.subr.mxu0 0.0
      %356 = vmatpush1.xpose.msra.mxu0 %v334
      %357 = vmatprep.subr.mxu0 0.0
      %358 = vmatpush1.xpose.msra.mxu0 %v337
      %359 = vmatprep.subr.mxu0 0.0
      %360 = vmatpush1.xpose.msra.mxu0 %v340
      %361 = vmatprep.subr.mxu0 0.0
      %362 = vmatpush1.xpose.msra.mxu0 %v343
      %363 = vmatprep.subr.mxu0 0.0
      %364 = vmatpush1.xpose.msra.mxu0 %v346
      %365 = vmatprep.subr.mxu0 0.0
      %366 = vmatpush1.xpose.msra.mxu0 %v349
      %367 = vmatprep.subr.mxu0 0.0
      %368 = vmatpush1.xpose.msra.mxu0 0.0
      %369 = vmatprep.subr.mxu0 0.0
      %370 = vmatpush1.xpose.msra.mxu0 0.0
      %371 = vmatprep.subr.mxu0 0.0
      %372 = vmatpush1.xpose.msra.mxu0 0.0
      %373 = vmatprep.subr.mxu0 0.0
      %374 = vmatpush1.xpose.msra.mxu0 0.0
      %375 = vmatprep.subr.mxu0 0.0
      %376 = vmatpush1.xpose.msra.mxu0 0.0
      %377 = vmatprep.subr.mxu0 0.0
      %378 = vmatpush1.xpose.msra.mxu0 0.0
      %379 = vmatprep.subr.mxu0 0.0
      %380 = vmatpush1.xpose.msra.mxu0 0.0
      %381 = vmatprep.subr.mxu0 0.0
      %382 = vmatpush1.xpose.msra.mxu0 0.0
      %383 = vmatprep.subr.mxu0 0.0
      %384 = vmatpush1.xpose.msra.mxu0 0.0
      %385 = vmatprep.subr.mxu0 0.0
      %386 = vmatpush1.xpose.msra.mxu0 0.0
      %387 = vmatprep.subr.mxu0 0.0
      %388 = vmatpush1.xpose.msra.mxu0 0.0
      %389 = vmatprep.subr.mxu0 0.0
      %390 = vmatpush1.xpose.msra.mxu0 0.0
      %391 = vmatprep.subr.mxu0 0.0
      %392 = vmatpush1.xpose.msra.mxu0 0.0
      %393 = vmatprep.subr.mxu0 0.0
      %394 = vmatpush1.xpose.msra.mxu0 0.0
      %395 = vmatprep.subr.mxu0 0.0
      %396 = vmatpush1.xpose.msra.mxu0 0.0
      %397 = vmatprep.subr.mxu0 0.0
      %398 = vmatpush1.xpose.msra.mxu0 0.0
      %399 = vmatprep.subr.mxu0 0.0
      %400 = vmatpush1.xpose.msra.mxu0 0.0
      %401 = vmatprep.subr.mxu0 0.0
      %402 = vmatpush1.xpose.msra.mxu0 0.0
      %403 = vmatprep.subr.mxu0 0.0
      %404 = vmatpush1.xpose.msra.mxu0 0.0
      %405 = vmatprep.subr.mxu0 0.0
      %406 = vmatpush1.xpose.msra.mxu0 0.0
      %407 = vmatprep.subr.mxu0 0.0
      %408 = vmatpush1.xpose.msra.mxu0 0.0
      %409 = vmatprep.subr.mxu0 0.0
      %410 = vmatpush1.xpose.msra.mxu0 0.0
      %411 = vmatprep.subr.mxu0 0.0
      %412 = vmatpush1.xpose.msra.mxu0 0.0
      %413 = vmatprep.subr.mxu0 0.0
      %414 = vmatpush1.xpose.msra.mxu0 0.0
      %415 = vmatprep.mubr.f32.mxu0 0.0
      %416 = vmatmul.mubr.f32.gmra.mrb[0].mxu0 %v304
      %v417 = vpop.f32.mrb[0].mxu0
      %v418 = vadd.f32 0.0, %v417
      %v419 = vpop.f32.mrb[0].mxu0
      %420 = vmatprep.mubr.f32.mxu0 0.0
      %421 = vmatmul.mubr.f32.gmra.mrb[0].mxu0 %v307
      %v422 = vpop.f32.mrb[0].mxu0
      %v423 = vadd.f32 0.0, %v422
      %v424 = vpop.f32.mrb[0].mxu0
      %425 = vmatprep.mubr.f32.mxu0 0.0
      %426 = vmatmul.mubr.f32.gmra.mrb[0].mxu0 %v310
      %v427 = vpop.f32.mrb[0].mxu0
      %v428 = vadd.f32 0.0, %v427
      %v429 = vpop.f32.mrb[0].mxu0
      %430 = vmatprep.mubr.f32.mxu0 0.0
      %431 = vmatmul.mubr.f32.gmra.mrb[0].mxu0 %v313
      %v432 = vpop.f32.mrb[0].mxu0
      %v433 = vadd.f32 0.0, %v432
      %v434 = vpop.f32.mrb[0].mxu0
      %435 = vmatprep.mubr.f32.mxu0 0.0
      %436 = vmatmul.mubr.f32.gmra.mrb[0].mxu0 %v316
      %v437 = vpop.f32.mrb[0].mxu0
      %v438 = vadd.f32 0.0, %v437
      %v439 = vpop.f32.mrb[0].mxu0
      %440 = vmatprep.mubr.f32.mxu0 0.0
      %441 = vmatmul.mubr.f32.gmra.mrb[0].mxu0 %v319
      %v442 = vpop.f32.mrb[0].mxu0
      %v443 = vadd.f32 0.0, %v442
      %v444 = vpop.f32.mrb[0].mxu0
      %445 = vmatprep.mubr.f32.mxu0 0.0
      %446 = vmatmul.mubr.f32.gmra.mrb[0].mxu0 %v322
      %v447 = vpop.f32.mrb[0].mxu0
      %v448 = vadd.f32 0.0, %v447
      %v449 = vpop.f32.mrb[0].mxu0
      %450 = vmatprep.mubr.f32.mxu0 0.0
      %451 = vmatmul.mubr.f32.gmra.mrb[0].mxu0 %v325
      %v452 = vpop.f32.mrb[0].mxu0
      %v453 = vadd.f32 0.0, %v452
      %v454 = vpop.f32.mrb[0].mxu0
      %455 = vdwg.mxu0
      %v456 = vmul.f32 %v418, 2.0
      %v457 = vmul.f32 %v423, 2.0
      %v458 = vmul.f32 %v428, 2.0
      %v459 = vmul.f32 %v433, 2.0
      %v460 = vmul.f32 %v438, 2.0
      %v461 = vmul.f32 %v443, 2.0
      %v462 = vmul.f32 %v448, 2.0
      %v463 = vmul.f32 %v453, 2.0
      %v464 = vld [vmem:[%s272] sm:$0x1]
      %v466 = vlaneseq
      %v467 = vshrl.u32 %v466, 7
      %v468 = vsub.s32 0, %v467
      %v469 = vrot.slane %v464, %v468
      %v471 = vsub.f32 %v456, %v469
      %v472 = vsub.f32 %v457, %v469
      %v473 = vsub.f32 %v458, %v469
      %v474 = vsub.f32 %v459, %v469
      %v475 = vsub.f32 %v460, %v469
      %v476 = vsub.f32 %v461, %v469
      %v477 = vsub.f32 %v462, %v469
      %v478 = vsub.f32 %v463, %v469
      %vm479 = vcmask 523264
      %480 = vst.msk [vmem:[%s284] sm:$0xff] %vm479, %v471
      %481 = vst.msk [vmem:[%s284 + $0x8] sm:$0xff] %vm479, %v472
      %482 = vst.msk [vmem:[%s284 + $0x10] sm:$0xff] %vm479, %v473
      %483 = vst.msk [vmem:[%s284 + $0x18] sm:$0xff] %vm479, %v474
      %484 = vst.msk [vmem:[%s284 + $0x20] sm:$0xff] %vm479, %v475
      %485 = vst.msk [vmem:[%s284 + $0x28] sm:$0xff] %vm479, %v476
      %486 = vst.msk [vmem:[%s284 + $0x30] sm:$0xff] %vm479, %v477
      %487 = vst.msk [vmem:[%s284 + $0x38] sm:$0xff] %vm479, %v478
      %s488 = smul.u32 8, %s20
      %p489 = scmp.lt.s32.totalorder %s19, 1
      %s490 = scalar_select %p489, %s19, 1
      %p491 = scmp.lt.s32.totalorder %s488, 7
      %s492 = scalar_select %p491, %s488, 7
      %p493 = scmp.lt.s32.totalorder %s21, 0
      %s494 = scalar_select %p493, %s21, 0
      %s495 = sadd.s32 %s494, %s492
      %s496 = smul.addr %s490, 8
      %s497 = sadd.s32 %s495, %s496
      %s498 = smul.addr %s497, 8
      %s499 = scalar_lea.vmem %s3, %s498
      // Predicated region
      $region33: #{_knn_indices.1} parent=31 // pred_check
        %p500 = pneg %p139
      $region34: #{_knn_indices.1} parent=31 // pred_check_branch
        %502 = sbr.rel (%p500) target = $region36
      $region35: #{_knn_indices.1} parent=31 // pred_region
        %s503 = smul.u32 8, %s20
      $region36: #{_knn_indices.1} parent=31 // pred_fallthru
        _
    $region32: #{_knn_indices.1} parent=5 // pred_fallthru
      _
    %p504 = scmp.le.s32.totalorder 2, %s9
    // Predicated region
    $region37: #{_knn_indices.1} parent=5 // pred_check
      %p505 = pneg %p504
    $region38: #{_knn_indices.1} parent=5 // pred_check_branch
      %507 = sbr.rel (%p505) target = $region40
    $region39: #{_knn_indices.1} parent=5 // pred_region
      %s508 = ssub.s32 %s9, 2
      // Predicated region
      $region41: #{_knn_indices.1} parent=39 // pred_check
        %p509 = pneg %p145
      $region42: #{_knn_indices.1} parent=39 // pred_check_branch
        %511 = sbr.rel (%p509) target = $region44
      $region43: #{_knn_indices.1} parent=39 // pred_region
        %s512 = smul.u32 8, %s23
        %p513 = scmp.lt.s32.totalorder %s22, 1
        %s514 = scalar_select %p513, %s22, 1
        %p515 = scmp.lt.s32.totalorder %s512, 7
        %s516 = scalar_select %p515, %s512, 7
        %p517 = scmp.lt.s32.totalorder %s24, 0
        %s518 = scalar_select %p517, %s24, 0
        %s519 = sadd.s32 %s518, %s516
        %s520 = smul.addr %s514, 8
        %s521 = sadd.s32 %s519, %s520
        %s522 = smul.addr %s521, 8
        %s523 = scalar_lea.vmem %s3, %s522
      $region44: #{_knn_indices.1} parent=39 // pred_fallthru
        _
    $region40: #{_knn_indices.1} parent=5 // pred_fallthru
      _
  $region6: #{_knn_indices.1} parent=0 // loop_footer
    %s13 = sadd.s32 1, %s9
  $region7: #{_knn_indices.1} parent=0 // loop_footer_branch
    %8 = sbr.rel target = $region3
  $region8: #{_knn_indices.1} parent=0 // loop_exit
    _

</llo_original>
